<compile_context>
chip_gen: v7x
topology: tpu7x:2x2x1
jax: 0.10.0
libtpu: 0.0.40
codegen_flags: <defaults>
</compile_context>

<pallas_src>
import jax
import jax.numpy as jnp
import numpy as np
from jax.experimental import pallas as pl
from jax.experimental.pallas import tpu as pltpu


def _local_attention_kernel(x3_ref, xf_ref, wband_ref, wcnn_ref, bcnn_ref,
                            wfc1_ref, bfc1_ref, wfc2_ref, bfc2_ref,
                            out_ref, fscr_ref):
    """x3: (Bblk,L,E) f32; xf: (Bblk,L*E) bf16; wband: (L*E,L) bf16;
    wcnn: (E,C) bf16; bcnn: (1,C) f32; wfc1: (L*C,H) bf16; bfc1: (1,H) f32;
    wfc2: (H,O) bf16; bfc2: (1,O) f32; out: (Bblk,O) f32; fscr: (Bblk,L*C) f32."""
    b_blk, L, E = x3_ref.shape
    C = wcnn_ref.shape[1]

    # ---- attention logits: one MXU matmul against the banded conv weight ----
    # raw[b, l] = sum_{l', e} x[b, l', e] * w_att[l'-l+p, e]  (zeros outside the window)
    # (Conv2d bias omitted: constant shift is invariant under the following softmax.)
    raw = jnp.dot(xf_ref[...], wband_ref[...],
                  preferred_element_type=jnp.float32)            # (Bblk, L) f32

    # ---- softmax over the sequence axis (torch Softmax(dim=2)) ----
    m = jnp.max(raw, axis=1, keepdims=True)
    e = jnp.exp(raw - m)
    denom = jnp.sum(e, axis=1, keepdims=True)
    scores = e * pl.reciprocal(denom, approx=True)               # EUP, (Bblk, L)

    # ---- reweight + Conv2d(1, C, (1, E)) + tanh ----
    xw = x3_ref[...] * scores[:, :, None]                        # (Bblk, L, E) f32
    xw2 = xw.reshape(b_blk * L, E).astype(jnp.bfloat16)          # minor dim kept: free
    feat = jnp.tanh(
        jnp.dot(xw2, wcnn_ref[...], preferred_element_type=jnp.float32)
        + bcnn_ref[...])                                         # (Bblk*L, C) f32
    feat3 = feat.reshape(b_blk, L, C)                            # minor dim kept: free

    # ---- flatten (Bblk, L, C) -> lane-dense (Bblk, L*C) via scratch stores ----
    # (avoids a minor-dim reshape; L static, so these are static lane-slice stores)
    for l in range(L):
        fscr_ref[:, l * C:(l + 1) * C] = feat3[:, l, :]
    f = fscr_ref[...].astype(jnp.bfloat16)                       # (Bblk, L*C)

    # ---- MLP: Linear -> (Dropout = identity at inference) -> ReLU -> Linear ----
    h = jnp.dot(f, wfc1_ref[...], preferred_element_type=jnp.float32) + bfc1_ref[...]
    h = jnp.maximum(h, 0.0).astype(jnp.bfloat16)
    out_ref[...] = (jnp.dot(h, wfc2_ref[...], preferred_element_type=jnp.float32)
                    + bfc2_ref[...])


def local_attention_forward(x, params, win_size, b_blk=None):
    """x: (B, L, E) float32. params in PyTorch-native shapes."""
    w_att, b_att, w_cnn, b_cnn, w_fc1, b_fc1, w_fc2, b_fc2 = params
    B, L, E = x.shape
    C = w_cnn.shape[0]
    H = w_fc1.shape[0]
    O = w_fc2.shape[0]
    p = (win_size - 1) // 2

    # --- parameter re-layout (plain JAX glue, computed outside the kernel) ---
    wa = w_att.reshape(win_size, E).astype(jnp.float32)          # from (1,1,WIN,E)
    # b_att is intentionally unused: raw + const is invariant under softmax.
    # Banded conv weight: W_band[l'*E + e, l] = w_att[l'-l+p, e] inside window, else 0.
    lp = jnp.arange(L)[:, None]
    ll = jnp.arange(L)[None, :]
    widx = lp - ll + p                                           # (L, L)
    valid = ((widx >= 0) & (widx < win_size)).astype(jnp.float32)
    band = wa[jnp.clip(widx, 0, win_size - 1)] * valid[:, :, None]   # (L, L, E)
    w_band = jnp.transpose(band, (0, 2, 1)).reshape(L * E, L)
    # TODO(synk): for large L replace the O(L^2*E) banded weight with an O(L*WIN)
    # roll/shift accumulation so it stays inside v7x's 64 MiB VMEM.

    w_cnn_t = w_cnn.reshape(C, E).T                              # (E, C)
    b_cnn2 = b_cnn.reshape(1, C)
    # torch flattens (B, C, L) with index c*L + l; the kernel produces l*C + c,
    # so permute the fc1 input dimension accordingly.
    w_fc1_t = jnp.transpose(w_fc1.reshape(H, C, L), (2, 1, 0)).reshape(L * C, H)
    b_fc1_2 = b_fc1.reshape(1, H)
    w_fc2_t = w_fc2.T                                            # (H, O)
    b_fc2_2 = b_fc2.reshape(1, O)

    # bf16 operands for the MXU (accumulation stays f32 inside the kernel).
    w_band = w_band.astype(jnp.bfloat16)
    w_cnn_t = w_cnn_t.astype(jnp.bfloat16)
    w_fc1_t = w_fc1_t.astype(jnp.bfloat16)
    w_fc2_t = w_fc2_t.astype(jnp.bfloat16)

    x = x.astype(jnp.float32)
    x_flat = x.reshape(B, L * E).astype(jnp.bfloat16)            # score-matmul operand

    if b_blk is None:
        b_blk = min(B, 8)                                        # batch block per grid step
    grid = (pl.cdiv(B, b_blk),)

    out = pl.pallas_call(
        _local_attention_kernel,
        out_shape=jax.ShapeDtypeStruct((B, O), jnp.float32),
        grid=grid,
        in_specs=[
            pl.BlockSpec((b_blk, L, E), lambda b: (b, 0, 0)),    # x (f32)
            pl.BlockSpec((b_blk, L * E), lambda b: (b, 0)),      # x flattened (bf16)
            pl.BlockSpec((L * E, L), lambda b: (0, 0)),          # banded attention weight
            pl.BlockSpec((E, C), lambda b: (0, 0)),              # cnn weight
            pl.BlockSpec((1, C), lambda b: (0, 0)),              # cnn bias
            pl.BlockSpec((L * C, H), lambda b: (0, 0)),          # fc1 weight
            pl.BlockSpec((1, H), lambda b: (0, 0)),              # fc1 bias
            pl.BlockSpec((H, O), lambda b: (0, 0)),              # fc2 weight
            pl.BlockSpec((1, O), lambda b: (0, 0)),              # fc2 bias
        ],
        out_specs=pl.BlockSpec((b_blk, O), lambda b: (b, 0)),
        scratch_shapes=[pltpu.VMEM((b_blk, L * C), jnp.float32)],
        compiler_params=pltpu.CompilerParams(
            dimension_semantics=("parallel",),                   # shards batch across TCs (v7x)
            vmem_limit_bytes=64 * 1024 * 1024),
    )(x, x_flat, w_band, w_cnn_t, b_cnn2, w_fc1_t, b_fc1_2, w_fc2_t, b_fc2_2)
    return out


def reference_forward(x, params, win_size):
    """Pure-JAX replica of the PyTorch forward (eval mode) for verification."""
    w_att, b_att, w_cnn, b_cnn, w_fc1, b_fc1, w_fc2, b_fc2 = params
    B, L, E = x.shape
    p = (win_size - 1) // 2
    x_pad = jnp.pad(x, ((0, 0), (p, p), (0, 0)))
    wa = w_att.reshape(win_size, E)
    raw = b_att.reshape(()) + sum(
        jnp.einsum("ble,e->bl", x_pad[:, w:w + L, :], wa[w]) for w in range(win_size)
    )
    scores = jax.nn.softmax(raw, axis=1)                         # (B, L)
    outw = x * scores[:, :, None]                                # (B, L, E)
    C = w_cnn.shape[0]
    y = jnp.tanh(
        jnp.einsum("ble,ce->bcl", outw, w_cnn.reshape(C, E)) + b_cnn[None, :, None]
    )                                                            # (B, C, L)
    flat = y.reshape(B, -1)                                      # (B, C*L), index c*L + l
    h = jax.nn.relu(flat @ w_fc1.T + b_fc1)
    return h @ w_fc2.T + b_fc2


if __name__ == "__main__":
    # small shapes consistent with the module
    B, L, E = 2, 16, 32          # batch, input_size (max_vis_len), embed_size
    WIN, C, H, O = 5, 4, 32, 8   # win_size, out_channels, hidden_size, output_size

    key = jax.random.PRNGKey(0)
    ks = jax.random.split(key, 9)
    s = 0.1
    w_att = s * jax.random.normal(ks[0], (1, 1, WIN, E), jnp.float32)   # Conv2d(1,1,(WIN,E))
    b_att = s * jax.random.normal(ks[1], (1,), jnp.float32)
    w_cnn = s * jax.random.normal(ks[2], (C, 1, 1, E), jnp.float32)     # Conv2d(1,C,(1,E))
    b_cnn = s * jax.random.normal(ks[3], (C,), jnp.float32)
    w_fc1 = s * jax.random.normal(ks[4], (H, C * L), jnp.float32)       # Linear(C*L, H)
    b_fc1 = s * jax.random.normal(ks[5], (H,), jnp.float32)
    w_fc2 = s * jax.random.normal(ks[6], (O, H), jnp.float32)           # Linear(H, O)
    b_fc2 = s * jax.random.normal(ks[7], (O,), jnp.float32)
    x = jax.random.normal(ks[8], (B, L, E), jnp.float32)

    params = (w_att, b_att, w_cnn, b_cnn, w_fc1, b_fc1, w_fc2, b_fc2)

    out = local_attention_forward(x, params, WIN)
    out = jax.block_until_ready(out)

    ref = reference_forward(x, params, WIN)
    # bf16 MXU inputs + approx reciprocal => compare at a relaxed tolerance.
    np.testing.assert_allclose(np.asarray(out), np.asarray(ref), rtol=2e-2, atol=1e-2)
    print("KERNEL_OK")
</pallas_src>

<mosaic_0001>
module attributes {stable_mosaic.version = 11 : i64} {
  func.func @_local_attention_kernel(%arg0: i32, %arg1: memref<2x16x32xf32, #tpu.memory_space<vmem>>, %arg2: memref<2x512xbf16, #tpu.memory_space<vmem>>, %arg3: memref<512x16xbf16, #tpu.memory_space<vmem>>, %arg4: memref<32x4xbf16, #tpu.memory_space<vmem>>, %arg5: memref<1x4xf32, #tpu.memory_space<vmem>>, %arg6: memref<64x32xbf16, #tpu.memory_space<vmem>>, %arg7: memref<1x32xf32, #tpu.memory_space<vmem>>, %arg8: memref<32x8xbf16, #tpu.memory_space<vmem>>, %arg9: memref<1x8xf32, #tpu.memory_space<vmem>>, %arg10: memref<2x8xf32, #tpu.memory_space<vmem>>, %arg11: memref<2x64xf32, #tpu.memory_space<vmem>>) attributes {dimension_semantics = [#tpu.dimension_semantics<parallel>], iteration_bounds = array<i64: 1>, scalar_prefetch = 0 : i64, scratch_operands = 1 : i64, tpu.core_type = #tpu.core_type<tc>, window_params = [{transform_indices = @transform_0, window_bounds = array<i64: 2, 16, 32>}, {transform_indices = @transform_1, window_bounds = array<i64: 2, 512>}, {pipeline_mode = #tpu.pipeline_mode<synchronous>, transform_indices = @transform_2, window_bounds = array<i64: 512, 16>}, {pipeline_mode = #tpu.pipeline_mode<synchronous>, transform_indices = @transform_3, window_bounds = array<i64: 32, 4>}, {pipeline_mode = #tpu.pipeline_mode<synchronous>, transform_indices = @transform_4, window_bounds = array<i64: 1, 4>}, {pipeline_mode = #tpu.pipeline_mode<synchronous>, transform_indices = @transform_5, window_bounds = array<i64: 64, 32>}, {pipeline_mode = #tpu.pipeline_mode<synchronous>, transform_indices = @transform_6, window_bounds = array<i64: 1, 32>}, {pipeline_mode = #tpu.pipeline_mode<synchronous>, transform_indices = @transform_7, window_bounds = array<i64: 32, 8>}, {pipeline_mode = #tpu.pipeline_mode<synchronous>, transform_indices = @transform_8, window_bounds = array<i64: 1, 8>}, {transform_indices = @transform_9, window_bounds = array<i64: 2, 8>}]} {
    %c0 = arith.constant 0 : index
    %c0_0 = arith.constant 0 : index
    %0 = vector.load %arg2[%c0, %c0_0] : memref<2x512xbf16, #tpu.memory_space<vmem>>, vector<2x512xbf16>
    %c0_1 = arith.constant 0 : index
    %c0_2 = arith.constant 0 : index
    %1 = vector.load %arg3[%c0_1, %c0_2] : memref<512x16xbf16, #tpu.memory_space<vmem>>, vector<512x16xbf16>
    %cst = arith.constant dense<0.000000e+00> : vector<2x16xf32>
    %2 = tpu.matmul %0, %1, %cst {dimension_numbers = #tpu.dot_dimension_numbers<[1], [0], [0], [1], [0, 0, 1, 1], [], []>} : vector<2x512xbf16>, vector<512x16xbf16>, vector<2x16xf32> -> vector<2x16xf32>
    %cst_3 = arith.constant dense<0xFF800000> : vector<2xf32>
    %3 = vector.multi_reduction <maximumf>, %2, %cst_3 [1] : vector<2x16xf32> to vector<2xf32>
    %4 = vector.shape_cast %3 : vector<2xf32> to vector<2x1xf32>
    %5 = vector.broadcast %4 : vector<2x1xf32> to vector<2x16xf32>
    %6 = arith.subf %2, %5 : vector<2x16xf32>
    %7 = math.exp %6 : vector<2x16xf32>
    %cst_4 = arith.constant dense<0.000000e+00> : vector<2xf32>
    %8 = vector.multi_reduction <add>, %7, %cst_4 [1] : vector<2x16xf32> to vector<2xf32>
    %9 = vector.shape_cast %8 : vector<2xf32> to vector<2x1xf32>
    %10 = tpu.reciprocal %9 {approx = true} : vector<2x1xf32> -> vector<2x1xf32>
    %11 = vector.broadcast %10 : vector<2x1xf32> to vector<2x16xf32>
    %12 = arith.mulf %7, %11 : vector<2x16xf32>
    %c0_5 = arith.constant 0 : index
    %c0_6 = arith.constant 0 : index
    %c0_7 = arith.constant 0 : index
    %13 = vector.load %arg1[%c0_5, %c0_6, %c0_7] : memref<2x16x32xf32, #tpu.memory_space<vmem>>, vector<2x16x32xf32>
    %14 = vector.shape_cast %12 : vector<2x16xf32> to vector<2x16x1xf32>
    %15 = vector.broadcast %14 : vector<2x16x1xf32> to vector<2x16x32xf32>
    %16 = arith.mulf %13, %15 : vector<2x16x32xf32>
    %17 = vector.shape_cast %16 : vector<2x16x32xf32> to vector<32x32xf32>
    %18 = arith.truncf %17 : vector<32x32xf32> to vector<32x32xbf16>
    %c0_8 = arith.constant 0 : index
    %c0_9 = arith.constant 0 : index
    %19 = vector.load %arg4[%c0_8, %c0_9] : memref<32x4xbf16, #tpu.memory_space<vmem>>, vector<32x4xbf16>
    %cst_10 = arith.constant dense<0.000000e+00> : vector<32x4xf32>
    %20 = tpu.matmul %18, %19, %cst_10 {dimension_numbers = #tpu.dot_dimension_numbers<[1], [0], [0], [1], [0, 0, 1, 1], [], []>} : vector<32x32xbf16>, vector<32x4xbf16>, vector<32x4xf32> -> vector<32x4xf32>
    %c0_11 = arith.constant 0 : index
    %c0_12 = arith.constant 0 : index
    %21 = vector.load %arg5[%c0_11, %c0_12] : memref<1x4xf32, #tpu.memory_space<vmem>>, vector<1x4xf32>
    %22 = vector.broadcast %21 : vector<1x4xf32> to vector<32x4xf32>
    %23 = arith.addf %20, %22 : vector<32x4xf32>
    %24 = math.tanh %23 : vector<32x4xf32>
    %25 = vector.shape_cast %24 : vector<32x4xf32> to vector<2x16x4xf32>
    %26 = vector.extract_strided_slice %25 {offsets = [0, 0, 0], sizes = [2, 1, 4], strides = [1, 1, 1]} : vector<2x16x4xf32> to vector<2x1x4xf32>
    %27 = vector.shape_cast %26 : vector<2x1x4xf32> to vector<2x4xf32>
    %c0_13 = arith.constant 0 : index
    %c0_14 = arith.constant 0 : index
    %28 = vector.load %arg11[%c0_13, %c0_14] : memref<2x64xf32, #tpu.memory_space<vmem>>, vector<2x4xf32>
    tpu.vector_store %arg11[%c0_13, %c0_14], %27 {strides = array<i32>} : memref<2x64xf32, #tpu.memory_space<vmem>>, vector<2x4xf32>,
    %29 = vector.extract_strided_slice %25 {offsets = [0, 1, 0], sizes = [2, 1, 4], strides = [1, 1, 1]} : vector<2x16x4xf32> to vector<2x1x4xf32>
    %30 = vector.shape_cast %29 : vector<2x1x4xf32> to vector<2x4xf32>
    %c0_15 = arith.constant 0 : index
    %c4 = arith.constant 4 : index
    %31 = vector.load %arg11[%c0_15, %c4] : memref<2x64xf32, #tpu.memory_space<vmem>>, vector<2x4xf32>
    tpu.vector_store %arg11[%c0_15, %c4], %30 {strides = array<i32>} : memref<2x64xf32, #tpu.memory_space<vmem>>, vector<2x4xf32>,
    %32 = vector.extract_strided_slice %25 {offsets = [0, 2, 0], sizes = [2, 1, 4], strides = [1, 1, 1]} : vector<2x16x4xf32> to vector<2x1x4xf32>
    %33 = vector.shape_cast %32 : vector<2x1x4xf32> to vector<2x4xf32>
    %c0_16 = arith.constant 0 : index
    %c8 = arith.constant 8 : index
    %34 = vector.load %arg11[%c0_16, %c8] : memref<2x64xf32, #tpu.memory_space<vmem>>, vector<2x4xf32>
    tpu.vector_store %arg11[%c0_16, %c8], %33 {strides = array<i32>} : memref<2x64xf32, #tpu.memory_space<vmem>>, vector<2x4xf32>,
    %35 = vector.extract_strided_slice %25 {offsets = [0, 3, 0], sizes = [2, 1, 4], strides = [1, 1, 1]} : vector<2x16x4xf32> to vector<2x1x4xf32>
    %36 = vector.shape_cast %35 : vector<2x1x4xf32> to vector<2x4xf32>
    %c0_17 = arith.constant 0 : index
    %c12 = arith.constant 12 : index
    %37 = vector.load %arg11[%c0_17, %c12] : memref<2x64xf32, #tpu.memory_space<vmem>>, vector<2x4xf32>
    tpu.vector_store %arg11[%c0_17, %c12], %36 {strides = array<i32>} : memref<2x64xf32, #tpu.memory_space<vmem>>, vector<2x4xf32>,
    %38 = vector.extract_strided_slice %25 {offsets = [0, 4, 0], sizes = [2, 1, 4], strides = [1, 1, 1]} : vector<2x16x4xf32> to vector<2x1x4xf32>
    %39 = vector.shape_cast %38 : vector<2x1x4xf32> to vector<2x4xf32>
    %c0_18 = arith.constant 0 : index
    %c16 = arith.constant 16 : index
    %40 = vector.load %arg11[%c0_18, %c16] : memref<2x64xf32, #tpu.memory_space<vmem>>, vector<2x4xf32>
    tpu.vector_store %arg11[%c0_18, %c16], %39 {strides = array<i32>} : memref<2x64xf32, #tpu.memory_space<vmem>>, vector<2x4xf32>,
    %41 = vector.extract_strided_slice %25 {offsets = [0, 5, 0], sizes = [2, 1, 4], strides = [1, 1, 1]} : vector<2x16x4xf32> to vector<2x1x4xf32>
    %42 = vector.shape_cast %41 : vector<2x1x4xf32> to vector<2x4xf32>
    %c0_19 = arith.constant 0 : index
    %c20 = arith.constant 20 : index
    %43 = vector.load %arg11[%c0_19, %c20] : memref<2x64xf32, #tpu.memory_space<vmem>>, vector<2x4xf32>
    tpu.vector_store %arg11[%c0_19, %c20], %42 {strides = array<i32>} : memref<2x64xf32, #tpu.memory_space<vmem>>, vector<2x4xf32>,
    %44 = vector.extract_strided_slice %25 {offsets = [0, 6, 0], sizes = [2, 1, 4], strides = [1, 1, 1]} : vector<2x16x4xf32> to vector<2x1x4xf32>
    %45 = vector.shape_cast %44 : vector<2x1x4xf32> to vector<2x4xf32>
    %c0_20 = arith.constant 0 : index
    %c24 = arith.constant 24 : index
    %46 = vector.load %arg11[%c0_20, %c24] : memref<2x64xf32, #tpu.memory_space<vmem>>, vector<2x4xf32>
    tpu.vector_store %arg11[%c0_20, %c24], %45 {strides = array<i32>} : memref<2x64xf32, #tpu.memory_space<vmem>>, vector<2x4xf32>,
    %47 = vector.extract_strided_slice %25 {offsets = [0, 7, 0], sizes = [2, 1, 4], strides = [1, 1, 1]} : vector<2x16x4xf32> to vector<2x1x4xf32>
    %48 = vector.shape_cast %47 : vector<2x1x4xf32> to vector<2x4xf32>
    %c0_21 = arith.constant 0 : index
    %c28 = arith.constant 28 : index
    %49 = vector.load %arg11[%c0_21, %c28] : memref<2x64xf32, #tpu.memory_space<vmem>>, vector<2x4xf32>
    tpu.vector_store %arg11[%c0_21, %c28], %48 {strides = array<i32>} : memref<2x64xf32, #tpu.memory_space<vmem>>, vector<2x4xf32>,
    %50 = vector.extract_strided_slice %25 {offsets = [0, 8, 0], sizes = [2, 1, 4], strides = [1, 1, 1]} : vector<2x16x4xf32> to vector<2x1x4xf32>
    %51 = vector.shape_cast %50 : vector<2x1x4xf32> to vector<2x4xf32>
    %c0_22 = arith.constant 0 : index
    %c32 = arith.constant 32 : index
    %52 = vector.load %arg11[%c0_22, %c32] : memref<2x64xf32, #tpu.memory_space<vmem>>, vector<2x4xf32>
    tpu.vector_store %arg11[%c0_22, %c32], %51 {strides = array<i32>} : memref<2x64xf32, #tpu.memory_space<vmem>>, vector<2x4xf32>,
    %53 = vector.extract_strided_slice %25 {offsets = [0, 9, 0], sizes = [2, 1, 4], strides = [1, 1, 1]} : vector<2x16x4xf32> to vector<2x1x4xf32>
    %54 = vector.shape_cast %53 : vector<2x1x4xf32> to vector<2x4xf32>
    %c0_23 = arith.constant 0 : index
    %c36 = arith.constant 36 : index
    %55 = vector.load %arg11[%c0_23, %c36] : memref<2x64xf32, #tpu.memory_space<vmem>>, vector<2x4xf32>
    tpu.vector_store %arg11[%c0_23, %c36], %54 {strides = array<i32>} : memref<2x64xf32, #tpu.memory_space<vmem>>, vector<2x4xf32>,
    %56 = vector.extract_strided_slice %25 {offsets = [0, 10, 0], sizes = [2, 1, 4], strides = [1, 1, 1]} : vector<2x16x4xf32> to vector<2x1x4xf32>
    %57 = vector.shape_cast %56 : vector<2x1x4xf32> to vector<2x4xf32>
    %c0_24 = arith.constant 0 : index
    %c40 = arith.constant 40 : index
    %58 = vector.load %arg11[%c0_24, %c40] : memref<2x64xf32, #tpu.memory_space<vmem>>, vector<2x4xf32>
    tpu.vector_store %arg11[%c0_24, %c40], %57 {strides = array<i32>} : memref<2x64xf32, #tpu.memory_space<vmem>>, vector<2x4xf32>,
    %59 = vector.extract_strided_slice %25 {offsets = [0, 11, 0], sizes = [2, 1, 4], strides = [1, 1, 1]} : vector<2x16x4xf32> to vector<2x1x4xf32>
    %60 = vector.shape_cast %59 : vector<2x1x4xf32> to vector<2x4xf32>
    %c0_25 = arith.constant 0 : index
    %c44 = arith.constant 44 : index
    %61 = vector.load %arg11[%c0_25, %c44] : memref<2x64xf32, #tpu.memory_space<vmem>>, vector<2x4xf32>
    tpu.vector_store %arg11[%c0_25, %c44], %60 {strides = array<i32>} : memref<2x64xf32, #tpu.memory_space<vmem>>, vector<2x4xf32>,
    %62 = vector.extract_strided_slice %25 {offsets = [0, 12, 0], sizes = [2, 1, 4], strides = [1, 1, 1]} : vector<2x16x4xf32> to vector<2x1x4xf32>
    %63 = vector.shape_cast %62 : vector<2x1x4xf32> to vector<2x4xf32>
    %c0_26 = arith.constant 0 : index
    %c48 = arith.constant 48 : index
    %64 = vector.load %arg11[%c0_26, %c48] : memref<2x64xf32, #tpu.memory_space<vmem>>, vector<2x4xf32>
    tpu.vector_store %arg11[%c0_26, %c48], %63 {strides = array<i32>} : memref<2x64xf32, #tpu.memory_space<vmem>>, vector<2x4xf32>,
    %65 = vector.extract_strided_slice %25 {offsets = [0, 13, 0], sizes = [2, 1, 4], strides = [1, 1, 1]} : vector<2x16x4xf32> to vector<2x1x4xf32>
    %66 = vector.shape_cast %65 : vector<2x1x4xf32> to vector<2x4xf32>
    %c0_27 = arith.constant 0 : index
    %c52 = arith.constant 52 : index
    %67 = vector.load %arg11[%c0_27, %c52] : memref<2x64xf32, #tpu.memory_space<vmem>>, vector<2x4xf32>
    tpu.vector_store %arg11[%c0_27, %c52], %66 {strides = array<i32>} : memref<2x64xf32, #tpu.memory_space<vmem>>, vector<2x4xf32>,
    %68 = vector.extract_strided_slice %25 {offsets = [0, 14, 0], sizes = [2, 1, 4], strides = [1, 1, 1]} : vector<2x16x4xf32> to vector<2x1x4xf32>
    %69 = vector.shape_cast %68 : vector<2x1x4xf32> to vector<2x4xf32>
    %c0_28 = arith.constant 0 : index
    %c56 = arith.constant 56 : index
    %70 = vector.load %arg11[%c0_28, %c56] : memref<2x64xf32, #tpu.memory_space<vmem>>, vector<2x4xf32>
    tpu.vector_store %arg11[%c0_28, %c56], %69 {strides = array<i32>} : memref<2x64xf32, #tpu.memory_space<vmem>>, vector<2x4xf32>,
    %71 = vector.extract_strided_slice %25 {offsets = [0, 15, 0], sizes = [2, 1, 4], strides = [1, 1, 1]} : vector<2x16x4xf32> to vector<2x1x4xf32>
    %72 = vector.shape_cast %71 : vector<2x1x4xf32> to vector<2x4xf32>
    %c0_29 = arith.constant 0 : index
    %c60 = arith.constant 60 : index
    %73 = vector.load %arg11[%c0_29, %c60] : memref<2x64xf32, #tpu.memory_space<vmem>>, vector<2x4xf32>
    tpu.vector_store %arg11[%c0_29, %c60], %72 {strides = array<i32>} : memref<2x64xf32, #tpu.memory_space<vmem>>, vector<2x4xf32>,
    %c0_30 = arith.constant 0 : index
    %c0_31 = arith.constant 0 : index
    %74 = vector.load %arg11[%c0_30, %c0_31] : memref<2x64xf32, #tpu.memory_space<vmem>>, vector<2x64xf32>
    %75 = arith.truncf %74 : vector<2x64xf32> to vector<2x64xbf16>
    %c0_32 = arith.constant 0 : index
    %c0_33 = arith.constant 0 : index
    %76 = vector.load %arg6[%c0_32, %c0_33] : memref<64x32xbf16, #tpu.memory_space<vmem>>, vector<64x32xbf16>
    %cst_34 = arith.constant dense<0.000000e+00> : vector<2x32xf32>
    %77 = tpu.matmul %75, %76, %cst_34 {dimension_numbers = #tpu.dot_dimension_numbers<[1], [0], [0], [1], [0, 0, 1, 1], [], []>} : vector<2x64xbf16>, vector<64x32xbf16>, vector<2x32xf32> -> vector<2x32xf32>
    %c0_35 = arith.constant 0 : index
    %c0_36 = arith.constant 0 : index
    %78 = vector.load %arg7[%c0_35, %c0_36] : memref<1x32xf32, #tpu.memory_space<vmem>>, vector<1x32xf32>
    %79 = vector.broadcast %78 : vector<1x32xf32> to vector<2x32xf32>
    %80 = arith.addf %77, %79 : vector<2x32xf32>
    %cst_37 = arith.constant 0.000000e+00 : f32
    %81 = vector.broadcast %cst_37 : f32 to vector<2x32xf32>
    %82 = arith.maximumf %80, %81 : vector<2x32xf32>
    %83 = arith.truncf %82 : vector<2x32xf32> to vector<2x32xbf16>
    %c0_38 = arith.constant 0 : index
    %c0_39 = arith.constant 0 : index
    %84 = vector.load %arg8[%c0_38, %c0_39] : memref<32x8xbf16, #tpu.memory_space<vmem>>, vector<32x8xbf16>
    %cst_40 = arith.constant dense<0.000000e+00> : vector<2x8xf32>
    %85 = tpu.matmul %83, %84, %cst_40 {dimension_numbers = #tpu.dot_dimension_numbers<[1], [0], [0], [1], [0, 0, 1, 1], [], []>} : vector<2x32xbf16>, vector<32x8xbf16>, vector<2x8xf32> -> vector<2x8xf32>
    %c0_41 = arith.constant 0 : index
    %c0_42 = arith.constant 0 : index
    %86 = vector.load %arg9[%c0_41, %c0_42] : memref<1x8xf32, #tpu.memory_space<vmem>>, vector<1x8xf32>
    %87 = vector.broadcast %86 : vector<1x8xf32> to vector<2x8xf32>
    %88 = arith.addf %85, %87 : vector<2x8xf32>
    %c0_43 = arith.constant 0 : index
    %c0_44 = arith.constant 0 : index
    %89 = vector.load %arg10[%c0_43, %c0_44] : memref<2x8xf32, #tpu.memory_space<vmem>>, vector<2x8xf32>
    tpu.vector_store %arg10[%c0_43, %c0_44], %88 {strides = array<i32>} : memref<2x8xf32, #tpu.memory_space<vmem>>, vector<2x8xf32>,
    return
  }
  func.func @transform_0(%arg0: i32) -> (i32, i32, i32) {
    %c0_i32 = arith.constant 0 : i32
    %c0_i32_0 = arith.constant 0 : i32
    %c0_i32_1 = arith.constant 0 : i32
    return %arg0, %c0_i32, %c0_i32_0 : i32, i32, i32
  }
  func.func @transform_1(%arg0: i32) -> (i32, i32) {
    %c0_i32 = arith.constant 0 : i32
    %c0_i32_0 = arith.constant 0 : i32
    return %arg0, %c0_i32 : i32, i32
  }
  func.func @transform_2(%arg0: i32) -> (i32, i32) {
    %c0_i32 = arith.constant 0 : i32
    %c0_i32_0 = arith.constant 0 : i32
    %c0_i32_1 = arith.constant 0 : i32
    return %c0_i32, %c0_i32_0 : i32, i32
  }
  func.func @transform_3(%arg0: i32) -> (i32, i32) {
    %c0_i32 = arith.constant 0 : i32
    %c0_i32_0 = arith.constant 0 : i32
    %c0_i32_1 = arith.constant 0 : i32
    return %c0_i32, %c0_i32_0 : i32, i32
  }
  func.func @transform_4(%arg0: i32) -> (i32, i32) {
    %c0_i32 = arith.constant 0 : i32
    %c0_i32_0 = arith.constant 0 : i32
    %c0_i32_1 = arith.constant 0 : i32
    return %c0_i32, %c0_i32_0 : i32, i32
  }
  func.func @transform_5(%arg0: i32) -> (i32, i32) {
    %c0_i32 = arith.constant 0 : i32
    %c0_i32_0 = arith.constant 0 : i32
    %c0_i32_1 = arith.constant 0 : i32
    return %c0_i32, %c0_i32_0 : i32, i32
  }
  func.func @transform_6(%arg0: i32) -> (i32, i32) {
    %c0_i32 = arith.constant 0 : i32
    %c0_i32_0 = arith.constant 0 : i32
    %c0_i32_1 = arith.constant 0 : i32
    return %c0_i32, %c0_i32_0 : i32, i32
  }
  func.func @transform_7(%arg0: i32) -> (i32, i32) {
    %c0_i32 = arith.constant 0 : i32
    %c0_i32_0 = arith.constant 0 : i32
    %c0_i32_1 = arith.constant 0 : i32
    return %c0_i32, %c0_i32_0 : i32, i32
  }
  func.func @transform_8(%arg0: i32) -> (i32, i32) {
    %c0_i32 = arith.constant 0 : i32
    %c0_i32_0 = arith.constant 0 : i32
    %c0_i32_1 = arith.constant 0 : i32
    return %c0_i32, %c0_i32_0 : i32, i32
  }
  func.func @transform_9(%arg0: i32) -> (i32, i32) {
    %c0_i32 = arith.constant 0 : i32
    %c0_i32_0 = arith.constant 0 : i32
    return %arg0, %c0_i32 : i32, i32
  }
}

</mosaic_0001>

<llo_original>
// kernel: tpu_custom_call.1
$region0: #{tpu_custom_call.1}
  #allocation0 [shape = 'u32[]', space=smem, size = 0x4, offset = 0x4, fixed_abs, tag = 'smem constant byte address 0x4 - core index']
  #allocation1 [shape = 'u32[144,128]{1,0:T(1,128)}', space=vmem, size = 0x12000, scoped, tag = 'internal scratch']
  #allocation2 [shape = 'f32[2,64]{1,0:T(2,128)}', space=vmem, size = 0x400, scoped, tag = 'scratch operand']
  %s0 = inlined_call_operand.hbm [shape: f32[2,16,32], index: 0, kind: input, shape index: {}]
  %s1 = inlined_call_operand.hbm [shape: bf16[2,512], index: 1, kind: input, shape index: {}]
  %s2 = inlined_call_operand.hbm [shape: bf16[512,16], index: 2, kind: input, shape index: {}]
  %s3 = inlined_call_operand.hbm [shape: bf16[32,4], index: 3, kind: input, shape index: {}]
  %s4 = inlined_call_operand.hbm [shape: f32[1,4], index: 4, kind: input, shape index: {}]
  %s5 = inlined_call_operand.hbm [shape: bf16[64,32], index: 5, kind: input, shape index: {}]
  %s6 = inlined_call_operand.hbm [shape: f32[1,32], index: 6, kind: input, shape index: {}]
  %s7 = inlined_call_operand.hbm [shape: bf16[32,8], index: 7, kind: input, shape index: {}]
  %s8 = inlined_call_operand.hbm [shape: f32[1,8], index: 8, kind: input, shape index: {}]
  %s9 = inlined_call_operand.hbm [shape: f32[2,8], index: 9, kind: output, shape index: {}]
  %s10 = sld [smem:[#allocation0]]
  $region82: #{tpu_custom_call.1} parent=0
    _
  %s12 = ssub.s32 1, %s10
  %s13 = scalar_select 0, %s12, %s10
  $region1: #{tpu_custom_call.1} parent=0
    #allocation3 [shape = 'u8[16384]{0}', space=vmem, size = 0x4000, scoped, tag = 'input window, operand 0, single buffered']
    #allocation4 [shape = 's32[1]{0}', space=sflag, size = 0x4, scoped, tag = 'scoped memory for tpu_custom_call.1']
    #allocation5 [shape = 's32[1]{0}', space=sflag, size = 0x4, scoped, tag = 'scoped memory for tpu_custom_call.1']
    #allocation6 [shape = 'u8[2048]{0}', space=vmem, size = 0x800, scoped, tag = 'input window, operand 1, single buffered']
    #allocation7 [shape = 's32[1]{0}', space=sflag, size = 0x4, scoped, tag = 'scoped memory for tpu_custom_call.1']
    #allocation8 [shape = 'u8[131072]{0}', space=vmem, size = 0x20000, scoped, tag = 'input window, operand 2, single buffered']
    #allocation9 [shape = 'u8[8192]{0}', space=vmem, size = 0x2000, scoped, tag = 'input window, operand 3, single buffered']
    #allocation10 [shape = 's32[1]{0}', space=sflag, size = 0x4, scoped, tag = 'scoped memory for tpu_custom_call.1']
    #allocation11 [shape = 'u8[512]{0}', space=vmem, size = 0x400, scoped, tag = 'input window, operand 4, single buffered']
    #allocation12 [shape = 'u8[16384]{0}', space=vmem, size = 0x4000, scoped, tag = 'input window, operand 5, single buffered']
    #allocation13 [shape = 's32[1]{0}', space=sflag, size = 0x4, scoped, tag = 'scoped memory for tpu_custom_call.1']
    #allocation14 [shape = 'u8[512]{0}', space=vmem, size = 0x400, scoped, tag = 'input window, operand 6, single buffered']
    #allocation15 [shape = 'u8[8192]{0}', space=vmem, size = 0x2000, scoped, tag = 'input window, operand 7, single buffered']
    #allocation16 [shape = 's32[1]{0}', space=sflag, size = 0x4, scoped, tag = 'scoped memory for tpu_custom_call.1']
    #allocation17 [shape = 'u8[512]{0}', space=vmem, size = 0x400, scoped, tag = 'input window, operand 8, single buffered']
    #allocation18 [shape = 'u8[1024]{0}', space=vmem, size = 0x400, scoped, tag = 'output window, operand 0, single buffered']
    %14 = vsyncpa [#allocation4], 0
    %15 = vsyncpa [#allocation7], 0
    %16 = vsyncpa [#allocation10], 0
    %17 = vsyncpa [#allocation13], 0
    %18 = vsyncpa [#allocation16], 0
    %19 = vsyncpa [#allocation5], 0
    // Predicated region
    $region2: #{tpu_custom_call.1} parent=1 // pred_check
      _
    $region3: #{tpu_custom_call.1} parent=1 // pred_check_branch
      %21 = sbr.rel (0) target = $region5
    $region4: #{tpu_custom_call.1} parent=1 // pred_region
      %s23 = ssub.s32 512, 512
      %24 = vsyncadd [#allocation4], %s23
      %s25 = sshll.u32 [#allocation3], 4
      %s26 = int_to_ptr.vmem [resolvable:$true] %s25
      %31 = dma.hbm_to_vmem [thread:$0]  %s0, 512, %s26, [#allocation4], 128, 128, 8
    $region5: #{tpu_custom_call.1} parent=1 // pred_fallthru
      _
    // Predicated region
    $region6: #{tpu_custom_call.1} parent=1 // pred_check
      _
    $region7: #{tpu_custom_call.1} parent=1 // pred_check_branch
      %33 = sbr.rel (0) target = $region9
    $region8: #{tpu_custom_call.1} parent=1 // pred_region
      %s35 = ssub.s32 64, 64
      %36 = vsyncadd [#allocation7], %s35
      %s38 = sshll.u32 [#allocation6], 4
      %s39 = int_to_ptr.vmem [resolvable:$true] %s38
      %41 = dma.hbm_to_vmem [thread:$0]  %s1, 64, %s39, [#allocation7]
    $region9: #{tpu_custom_call.1} parent=1 // pred_fallthru
      _
    // Predicated region
    $region10: #{tpu_custom_call.1} parent=1 // pred_check
      _
    $region11: #{tpu_custom_call.1} parent=1 // pred_check_branch
      %43 = sbr.rel (0) target = $region13
    $region12: #{tpu_custom_call.1} parent=1 // pred_region
      %s45 = ssub.s32 4096, 4096
      %46 = vsyncadd [#allocation7], %s45
      %s47 = sshll.u32 [#allocation8], 4
      %s48 = int_to_ptr.vmem [resolvable:$true] %s47
      %53 = dma.hbm_to_vmem [thread:$0]  %s2, 4096, %s48, [#allocation7], 64, 64, 4
    $region13: #{tpu_custom_call.1} parent=1 // pred_fallthru
      _
    // Predicated region
    $region14: #{tpu_custom_call.1} parent=1 // pred_check
      _
    $region15: #{tpu_custom_call.1} parent=1 // pred_check_branch
      %55 = sbr.rel (0) target = $region17
    $region16: #{tpu_custom_call.1} parent=1 // pred_region
      %s57 = ssub.s32 256, 256
      %58 = vsyncadd [#allocation10], %s57
      %s59 = sshll.u32 [#allocation9], 4
      %s60 = int_to_ptr.vmem [resolvable:$true] %s59
      %65 = dma.hbm_to_vmem [thread:$0]  %s3, 256, %s60, [#allocation10], 64, 64, 4
    $region17: #{tpu_custom_call.1} parent=1 // pred_fallthru
      _
    // Predicated region
    $region18: #{tpu_custom_call.1} parent=1 // pred_check
      _
    $region19: #{tpu_custom_call.1} parent=1 // pred_check_branch
      %67 = sbr.rel (0) target = $region21
    $region20: #{tpu_custom_call.1} parent=1 // pred_region
      %s69 = ssub.s32 16, 16
      %70 = vsyncadd [#allocation10], %s69
      %s72 = sshll.u32 [#allocation11], 4
      %s73 = int_to_ptr.vmem [resolvable:$true] %s72
      %75 = dma.hbm_to_vmem [thread:$0]  %s4, 16, %s73, [#allocation10]
    $region21: #{tpu_custom_call.1} parent=1 // pred_fallthru
      _
    // Predicated region
    $region22: #{tpu_custom_call.1} parent=1 // pred_check
      _
    $region23: #{tpu_custom_call.1} parent=1 // pred_check_branch
      %77 = sbr.rel (0) target = $region25
    $region24: #{tpu_custom_call.1} parent=1 // pred_region
      %s79 = ssub.s32 512, 512
      %80 = vsyncadd [#allocation13], %s79
      %s81 = sshll.u32 [#allocation12], 4
      %s82 = int_to_ptr.vmem [resolvable:$true] %s81
      %87 = dma.hbm_to_vmem [thread:$0]  %s5, 512, %s82, [#allocation13], 64, 64, 4
    $region25: #{tpu_custom_call.1} parent=1 // pred_fallthru
      _
    // Predicated region
    $region26: #{tpu_custom_call.1} parent=1 // pred_check
      _
    $region27: #{tpu_custom_call.1} parent=1 // pred_check_branch
      %89 = sbr.rel (0) target = $region29
    $region28: #{tpu_custom_call.1} parent=1 // pred_region
      %s91 = ssub.s32 16, 16
      %92 = vsyncadd [#allocation13], %s91
      %s94 = sshll.u32 [#allocation14], 4
      %s95 = int_to_ptr.vmem [resolvable:$true] %s94
      %97 = dma.hbm_to_vmem [thread:$0]  %s6, 16, %s95, [#allocation13]
    $region29: #{tpu_custom_call.1} parent=1 // pred_fallthru
      _
    // Predicated region
    $region30: #{tpu_custom_call.1} parent=1 // pred_check
      _
    $region31: #{tpu_custom_call.1} parent=1 // pred_check_branch
      %99 = sbr.rel (0) target = $region33
    $region32: #{tpu_custom_call.1} parent=1 // pred_region
      %s101 = ssub.s32 256, 256
      %102 = vsyncadd [#allocation16], %s101
      %s103 = sshll.u32 [#allocation15], 4
      %s104 = int_to_ptr.vmem [resolvable:$true] %s103
      %109 = dma.hbm_to_vmem [thread:$0]  %s7, 256, %s104, [#allocation16], 64, 64, 4
    $region33: #{tpu_custom_call.1} parent=1 // pred_fallthru
      _
    // Predicated region
    $region34: #{tpu_custom_call.1} parent=1 // pred_check
      _
    $region35: #{tpu_custom_call.1} parent=1 // pred_check_branch
      %111 = sbr.rel (0) target = $region37
    $region36: #{tpu_custom_call.1} parent=1 // pred_region
      %s113 = ssub.s32 16, 16
      %114 = vsyncadd [#allocation16], %s113
      %s116 = sshll.u32 [#allocation17], 4
      %s117 = int_to_ptr.vmem [resolvable:$true] %s116
      %119 = dma.hbm_to_vmem [thread:$0]  %s8, 16, %s117, [#allocation16]
    $region37: #{tpu_custom_call.1} parent=1 // pred_fallthru
      _
    // Predicated region
    $region38: #{tpu_custom_call.1} parent=1 // pred_check
      _
    $region39: #{tpu_custom_call.1} parent=1 // pred_check_branch
      %121 = sbr.rel (0) target = $region41
    $region40: #{tpu_custom_call.1} parent=1 // pred_region
      %122 = dma.done [#allocation4], 512
    $region41: #{tpu_custom_call.1} parent=1 // pred_fallthru
      _
    // Predicated region
    $region42: #{tpu_custom_call.1} parent=1 // pred_check
      _
    $region43: #{tpu_custom_call.1} parent=1 // pred_check_branch
      %124 = sbr.rel (0) target = $region45
    $region44: #{tpu_custom_call.1} parent=1 // pred_region
      %125 = dma.done [#allocation7], 64
    $region45: #{tpu_custom_call.1} parent=1 // pred_fallthru
      _
    // Predicated region
    $region46: #{tpu_custom_call.1} parent=1 // pred_check
      _
    $region47: #{tpu_custom_call.1} parent=1 // pred_check_branch
      %127 = sbr.rel (0) target = $region49
    $region48: #{tpu_custom_call.1} parent=1 // pred_region
      %128 = dma.done [#allocation7], 4096
    $region49: #{tpu_custom_call.1} parent=1 // pred_fallthru
      _
    // Predicated region
    $region50: #{tpu_custom_call.1} parent=1 // pred_check
      _
    $region51: #{tpu_custom_call.1} parent=1 // pred_check_branch
      %130 = sbr.rel (0) target = $region53
    $region52: #{tpu_custom_call.1} parent=1 // pred_region
      %131 = dma.done [#allocation10], 256
    $region53: #{tpu_custom_call.1} parent=1 // pred_fallthru
      _
    // Predicated region
    $region54: #{tpu_custom_call.1} parent=1 // pred_check
      _
    $region55: #{tpu_custom_call.1} parent=1 // pred_check_branch
      %133 = sbr.rel (0) target = $region57
    $region56: #{tpu_custom_call.1} parent=1 // pred_region
      %134 = dma.done [#allocation10], 16
    $region57: #{tpu_custom_call.1} parent=1 // pred_fallthru
      _
    // Predicated region
    $region58: #{tpu_custom_call.1} parent=1 // pred_check
      _
    $region59: #{tpu_custom_call.1} parent=1 // pred_check_branch
      %136 = sbr.rel (0) target = $region61
    $region60: #{tpu_custom_call.1} parent=1 // pred_region
      %137 = dma.done [#allocation13], 512
    $region61: #{tpu_custom_call.1} parent=1 // pred_fallthru
      _
    // Predicated region
    $region62: #{tpu_custom_call.1} parent=1 // pred_check
      _
    $region63: #{tpu_custom_call.1} parent=1 // pred_check_branch
      %139 = sbr.rel (0) target = $region65
    $region64: #{tpu_custom_call.1} parent=1 // pred_region
      %140 = dma.done [#allocation13], 16
    $region65: #{tpu_custom_call.1} parent=1 // pred_fallthru
      _
    // Predicated region
    $region66: #{tpu_custom_call.1} parent=1 // pred_check
      _
    $region67: #{tpu_custom_call.1} parent=1 // pred_check_branch
      %142 = sbr.rel (0) target = $region69
    $region68: #{tpu_custom_call.1} parent=1 // pred_region
      %143 = dma.done [#allocation16], 256
    $region69: #{tpu_custom_call.1} parent=1 // pred_fallthru
      _
    // Predicated region
    $region70: #{tpu_custom_call.1} parent=1 // pred_check
      _
    $region71: #{tpu_custom_call.1} parent=1 // pred_check_branch
      %145 = sbr.rel (0) target = $region73
    $region72: #{tpu_custom_call.1} parent=1 // pred_region
      %146 = dma.done [#allocation16], 16
    $region73: #{tpu_custom_call.1} parent=1 // pred_fallthru
      _
    %v148 = vld [vmem:[#allocation6] sm:$0xf]
    %v149 = vld [vmem:[#allocation8] sm:$0xf]
    %v150 = vld [vmem:[#allocation8 + $0x4] sm:$0xf]
    %v151 = vld [vmem:[#allocation8 + $0x8] sm:$0xf]
    %v152 = vld [vmem:[#allocation8 + $0xc] sm:$0xf]
    %v153 = vld [vmem:[#allocation8 + $0x10] sm:$0xf]
    %v154 = vld [vmem:[#allocation8 + $0x14] sm:$0xf]
    %v155 = vld [vmem:[#allocation8 + $0x18] sm:$0xf]
    %v156 = vld [vmem:[#allocation8 + $0x1c] sm:$0xf]
    %v157 = vld [vmem:[#allocation8 + $0x20] sm:$0xf]
    %v158 = vld [vmem:[#allocation8 + $0x24] sm:$0xf]
    %v159 = vld [vmem:[#allocation8 + $0x28] sm:$0xf]
    %v160 = vld [vmem:[#allocation8 + $0x2c] sm:$0xf]
    %v161 = vld [vmem:[#allocation8 + $0x30] sm:$0xf]
    %v162 = vld [vmem:[#allocation8 + $0x34] sm:$0xf]
    %v163 = vld [vmem:[#allocation8 + $0x38] sm:$0xf]
    %v164 = vld [vmem:[#allocation8 + $0x3c] sm:$0xf]
    %v165 = vld [vmem:[#allocation8 + $0x40] sm:$0xf]
    %v166 = vld [vmem:[#allocation8 + $0x44] sm:$0xf]
    %v167 = vld [vmem:[#allocation8 + $0x48] sm:$0xf]
    %v168 = vld [vmem:[#allocation8 + $0x4c] sm:$0xf]
    %v169 = vld [vmem:[#allocation8 + $0x50] sm:$0xf]
    %v170 = vld [vmem:[#allocation8 + $0x54] sm:$0xf]
    %v171 = vld [vmem:[#allocation8 + $0x58] sm:$0xf]
    %v172 = vld [vmem:[#allocation8 + $0x5c] sm:$0xf]
    %v173 = vld [vmem:[#allocation8 + $0x60] sm:$0xf]
    %v174 = vld [vmem:[#allocation8 + $0x64] sm:$0xf]
    %v175 = vld [vmem:[#allocation8 + $0x68] sm:$0xf]
    %v176 = vld [vmem:[#allocation8 + $0x6c] sm:$0xf]
    %v177 = vld [vmem:[#allocation8 + $0x70] sm:$0xf]
    %v178 = vld [vmem:[#allocation8 + $0x74] sm:$0xf]
    %v179 = vld [vmem:[#allocation8 + $0x78] sm:$0xf]
    %v180 = vld [vmem:[#allocation8 + $0x7c] sm:$0xf]
    %v181 = vld [vmem:[#allocation8 + $0x80] sm:$0xf]
    %v182 = vld [vmem:[#allocation8 + $0x84] sm:$0xf]
    %v183 = vld [vmem:[#allocation8 + $0x88] sm:$0xf]
    %v184 = vld [vmem:[#allocation8 + $0x8c] sm:$0xf]
    %v185 = vld [vmem:[#allocation8 + $0x90] sm:$0xf]
    %v186 = vld [vmem:[#allocation8 + $0x94] sm:$0xf]
    %v187 = vld [vmem:[#allocation8 + $0x98] sm:$0xf]
    %v188 = vld [vmem:[#allocation8 + $0x9c] sm:$0xf]
    %v189 = vld [vmem:[#allocation8 + $0xa0] sm:$0xf]
    %v190 = vld [vmem:[#allocation8 + $0xa4] sm:$0xf]
    %v191 = vld [vmem:[#allocation8 + $0xa8] sm:$0xf]
    %v192 = vld [vmem:[#allocation8 + $0xac] sm:$0xf]
    %v193 = vld [vmem:[#allocation8 + $0xb0] sm:$0xf]
    %v194 = vld [vmem:[#allocation8 + $0xb4] sm:$0xf]
    %v195 = vld [vmem:[#allocation8 + $0xb8] sm:$0xf]
    %v196 = vld [vmem:[#allocation8 + $0xbc] sm:$0xf]
    %v197 = vld [vmem:[#allocation8 + $0xc0] sm:$0xf]
    %v198 = vld [vmem:[#allocation8 + $0xc4] sm:$0xf]
    %v199 = vld [vmem:[#allocation8 + $0xc8] sm:$0xf]
    %v200 = vld [vmem:[#allocation8 + $0xcc] sm:$0xf]
    %v201 = vld [vmem:[#allocation8 + $0xd0] sm:$0xf]
    %v202 = vld [vmem:[#allocation8 + $0xd4] sm:$0xf]
    %v203 = vld [vmem:[#allocation8 + $0xd8] sm:$0xf]
    %v204 = vld [vmem:[#allocation8 + $0xdc] sm:$0xf]
    %v205 = vld [vmem:[#allocation8 + $0xe0] sm:$0xf]
    %v206 = vld [vmem:[#allocation8 + $0xe4] sm:$0xf]
    %v207 = vld [vmem:[#allocation8 + $0xe8] sm:$0xf]
    %v208 = vld [vmem:[#allocation8 + $0xec] sm:$0xf]
    %v209 = vld [vmem:[#allocation8 + $0xf0] sm:$0xf]
    %v210 = vld [vmem:[#allocation8 + $0xf4] sm:$0xf]
    %v211 = vld [vmem:[#allocation8 + $0xf8] sm:$0xf]
    %v212 = vld [vmem:[#allocation8 + $0xfc] sm:$0xf]
    %v215 = vunpack.c.l.s4 1966171168
    %v216 = vunpack.c.0.s8 %v215
    %v217 = vlaneseq
    %v218 = vshrl.u32 %v217, 7
    %v219 = vsub.s32 %v216, %v218
    %v220 = vrot.slane %v148, %v219
    %v221 = vcombine.high %v220, %v220
    %v223 = vunpack.c.l.s4 1966171168
    %v224 = vunpack.c.0.s8 %v223
    %v225 = vlaneseq
    %v226 = vshrl.u32 %v225, 7
    %v227 = vsub.s32 %v224, %v226
    %v228 = vrot.slane %v220, %v227
    %v230 = vunpack.c.l.s4 1966171168
    %v231 = vunpack.c.0.s8 %v230
    %v232 = vlaneseq
    %v233 = vshrl.u32 %v232, 7
    %v234 = vsub.s32 %v231, %v233
    %v235 = vrot.slane %v221, %v234
    %v236 = vcombine.high %v228, %v228
    %v237 = vcombine.high %v235, %v235
    %v306 = vunpack.c.l.b16 %v149
    %v307 = vunpack.c.l.b16 %v150
    %v308 = vunpack.c.l.b16 %v151
    %v309 = vunpack.c.l.b16 %v152
    %v310 = vunpack.c.l.b16 %v153
    %v311 = vunpack.c.l.b16 %v154
    %v312 = vunpack.c.l.b16 %v155
    %v313 = vunpack.c.l.b16 %v156
    %v314 = vunpack.c.l.b16 %v157
    %v315 = vunpack.c.l.b16 %v158
    %v316 = vunpack.c.l.b16 %v159
    %v317 = vunpack.c.l.b16 %v160
    %v318 = vunpack.c.l.b16 %v161
    %v319 = vunpack.c.l.b16 %v162
    %v320 = vunpack.c.l.b16 %v163
    %v321 = vunpack.c.l.b16 %v164
    %v322 = vunpack.c.l.b16 %v165
    %v323 = vunpack.c.l.b16 %v166
    %v324 = vunpack.c.l.b16 %v167
    %v325 = vunpack.c.l.b16 %v168
    %v326 = vunpack.c.l.b16 %v169
    %v327 = vunpack.c.l.b16 %v170
    %v328 = vunpack.c.l.b16 %v171
    %v329 = vunpack.c.l.b16 %v172
    %v330 = vunpack.c.l.b16 %v173
    %v331 = vunpack.c.l.b16 %v174
    %v332 = vunpack.c.l.b16 %v175
    %v333 = vunpack.c.l.b16 %v176
    %v334 = vunpack.c.l.b16 %v177
    %v335 = vunpack.c.l.b16 %v178
    %v336 = vunpack.c.l.b16 %v179
    %v337 = vunpack.c.l.b16 %v180
    %v338 = vunpack.c.l.b16 %v181
    %v339 = vunpack.c.l.b16 %v182
    %v340 = vunpack.c.l.b16 %v183
    %v341 = vunpack.c.l.b16 %v184
    %v342 = vunpack.c.l.b16 %v185
    %v343 = vunpack.c.l.b16 %v186
    %v344 = vunpack.c.l.b16 %v187
    %v345 = vunpack.c.l.b16 %v188
    %v346 = vunpack.c.l.b16 %v189
    %v347 = vunpack.c.l.b16 %v190
    %v348 = vunpack.c.l.b16 %v191
    %v349 = vunpack.c.l.b16 %v192
    %v350 = vunpack.c.l.b16 %v193
    %v351 = vunpack.c.l.b16 %v194
    %v352 = vunpack.c.l.b16 %v195
    %v353 = vunpack.c.l.b16 %v196
    %v354 = vunpack.c.l.b16 %v197
    %v355 = vunpack.c.l.b16 %v198
    %v356 = vunpack.c.l.b16 %v199
    %v357 = vunpack.c.l.b16 %v200
    %v358 = vunpack.c.l.b16 %v201
    %v359 = vunpack.c.l.b16 %v202
    %v360 = vunpack.c.l.b16 %v203
    %v361 = vunpack.c.l.b16 %v204
    %v362 = vunpack.c.l.b16 %v205
    %v363 = vunpack.c.l.b16 %v206
    %v364 = vunpack.c.l.b16 %v207
    %v365 = vunpack.c.l.b16 %v208
    %v366 = vunpack.c.l.b16 %v209
    %v367 = vunpack.c.l.b16 %v210
    %v368 = vunpack.c.l.b16 %v211
    %v369 = vunpack.c.l.b16 %v212
    %v370 = vpack.c.b16 %v307, %v306
    %v371 = vpack.c.b16 %v309, %v308
    %v372 = vpack.c.b16 %v311, %v310
    %v373 = vpack.c.b16 %v313, %v312
    %v374 = vpack.c.b16 %v315, %v314
    %v375 = vpack.c.b16 %v317, %v316
    %v376 = vpack.c.b16 %v319, %v318
    %v377 = vpack.c.b16 %v321, %v320
    %v378 = vpack.c.b16 %v323, %v322
    %v379 = vpack.c.b16 %v325, %v324
    %v380 = vpack.c.b16 %v327, %v326
    %v381 = vpack.c.b16 %v329, %v328
    %v382 = vpack.c.b16 %v331, %v330
    %v383 = vpack.c.b16 %v333, %v332
    %v384 = vpack.c.b16 %v335, %v334
    %v385 = vpack.c.b16 %v337, %v336
    %v386 = vpack.c.b16 %v339, %v338
    %v387 = vpack.c.b16 %v341, %v340
    %v388 = vpack.c.b16 %v343, %v342
    %v389 = vpack.c.b16 %v345, %v344
    %v390 = vpack.c.b16 %v347, %v346
    %v391 = vpack.c.b16 %v349, %v348
    %v392 = vpack.c.b16 %v351, %v350
    %v393 = vpack.c.b16 %v353, %v352
    %v394 = vpack.c.b16 %v355, %v354
    %v395 = vpack.c.b16 %v357, %v356
    %v396 = vpack.c.b16 %v359, %v358
    %v397 = vpack.c.b16 %v361, %v360
    %v398 = vpack.c.b16 %v363, %v362
    %v399 = vpack.c.b16 %v365, %v364
    %v400 = vpack.c.b16 %v367, %v366
    %v401 = vpack.c.b16 %v369, %v368
    %434 = vmatprep.subr.bf16.mxu0 0
    %435 = vmatpush1.bf16.msra.mxu0 %v370
    %436 = vmatprep.subr.bf16.mxu0 0
    %437 = vmatpush1.bf16.msra.mxu0 %v371
    %438 = vmatprep.subr.bf16.mxu0 0
    %439 = vmatpush1.bf16.msra.mxu0 %v372
    %440 = vmatprep.subr.bf16.mxu0 0
    %441 = vmatpush1.bf16.msra.mxu0 %v373
    %442 = vmatprep.subr.bf16.mxu0 0
    %443 = vmatpush1.bf16.msra.mxu0 %v374
    %444 = vmatprep.subr.bf16.mxu0 0
    %445 = vmatpush1.bf16.msra.mxu0 %v375
    %446 = vmatprep.subr.bf16.mxu0 0
    %447 = vmatpush1.bf16.msra.mxu0 %v376
    %448 = vmatprep.subr.bf16.mxu0 0
    %449 = vmatpush1.bf16.msra.mxu0 %v377
    %450 = vmatprep.subr.bf16.mxu0 0
    %451 = vmatpush1.bf16.msra.mxu0 %v378
    %452 = vmatprep.subr.bf16.mxu0 0
    %453 = vmatpush1.bf16.msra.mxu0 %v379
    %454 = vmatprep.subr.bf16.mxu0 0
    %455 = vmatpush1.bf16.msra.mxu0 %v380
    %456 = vmatprep.subr.bf16.mxu0 0
    %457 = vmatpush1.bf16.msra.mxu0 %v381
    %458 = vmatprep.subr.bf16.mxu0 0
    %459 = vmatpush1.bf16.msra.mxu0 %v382
    %460 = vmatprep.subr.bf16.mxu0 0
    %461 = vmatpush1.bf16.msra.mxu0 %v383
    %462 = vmatprep.subr.bf16.mxu0 0
    %463 = vmatpush1.bf16.msra.mxu0 %v384
    %464 = vmatprep.subr.bf16.mxu0 0
    %465 = vmatpush1.bf16.msra.mxu0 %v385
    %466 = vmatprep.mubr.bf16.mxu0 %v235
    %467 = vmatmul.mubr.bf16.gmra.mrb[0].mxu0 %v228
    %v468 = vpop.f32.mrb[0].mxu0
    %v469 = vadd.f32 0.0, %v468
    %v470 = vpop.f32.mrb[0].mxu0
    %v471 = vpop.f32.mrb[0].mxu0
    %v472 = vpop.f32.mrb[0].mxu0
    %473 = vdwg.mxu0
    %474 = vmatprep.subr.bf16.mxu0 0
    %475 = vmatpush1.bf16.msra.mxu0 %v386
    %476 = vmatprep.subr.bf16.mxu0 0
    %477 = vmatpush1.bf16.msra.mxu0 %v387
    %478 = vmatprep.subr.bf16.mxu0 0
    %479 = vmatpush1.bf16.msra.mxu0 %v388
    %480 = vmatprep.subr.bf16.mxu0 0
    %481 = vmatpush1.bf16.msra.mxu0 %v389
    %482 = vmatprep.subr.bf16.mxu0 0
    %483 = vmatpush1.bf16.msra.mxu0 %v390
    %484 = vmatprep.subr.bf16.mxu0 0
    %485 = vmatpush1.bf16.msra.mxu0 %v391
    %486 = vmatprep.subr.bf16.mxu0 0
    %487 = vmatpush1.bf16.msra.mxu0 %v392
    %488 = vmatprep.subr.bf16.mxu0 0
    %489 = vmatpush1.bf16.msra.mxu0 %v393
    %490 = vmatprep.subr.bf16.mxu0 0
    %491 = vmatpush1.bf16.msra.mxu0 %v394
    %492 = vmatprep.subr.bf16.mxu0 0
    %493 = vmatpush1.bf16.msra.mxu0 %v395
    %494 = vmatprep.subr.bf16.mxu0 0
    %495 = vmatpush1.bf16.msra.mxu0 %v396
    %496 = vmatprep.subr.bf16.mxu0 0
    %497 = vmatpush1.bf16.msra.mxu0 %v397
    %498 = vmatprep.subr.bf16.mxu0 0
    %499 = vmatpush1.bf16.msra.mxu0 %v398
    %500 = vmatprep.subr.bf16.mxu0 0
    %501 = vmatpush1.bf16.msra.mxu0 %v399
    %502 = vmatprep.subr.bf16.mxu0 0
    %503 = vmatpush1.bf16.msra.mxu0 %v400
    %504 = vmatprep.subr.bf16.mxu0 0
    %505 = vmatpush1.bf16.msra.mxu0 %v401
    %506 = vmatprep.mubr.bf16.mxu0 %v237
    %507 = vmatmul.mubr.bf16.gmra.mrb[0].mxu0 %v236
    %v508 = vpop.f32.mrb[0].mxu0
    %v509 = vadd.f32 %v469, %v508
    %v510 = vpop.f32.mrb[0].mxu0
    %v511 = vpop.f32.mrb[0].mxu0
    %v512 = vpop.f32.mrb[0].mxu0
    %513 = vdwg.mxu0
    %vm514 = vcmask 123904
    %v515 = vsel %vm514, %v509, -inf
    %516 = vmax.xlane.f32.xlu0 %v515
    %v517 = vpop.xlane.xlu0 %516
    %v518 = vsub.f32 %v509, %v517
    %v519 = vmul.f32 %v518, 1.442695
    %v520 = vpow.pop %v519
    %v521 = vsel %vm514, %v520, 0.0
    %522 = vadd.xlane.f32.xlu0 %v521
    %v523 = vpop.xlane.xlu0 %522
    %v524 = vrcp.pop %v523
    %v525 = vmul.f32 %v520, %v524
    %v526 = vld [vmem:[#allocation3] sm:$0xff]
    %v527 = vld [vmem:[#allocation3 + $0x8] sm:$0xff]
    %v528 = vld [vmem:[#allocation3 + $0x10] sm:$0xff]
    %v529 = vld [vmem:[#allocation3 + $0x18] sm:$0xff]
    %v530 = vlaneseq
    %v531 = vshrl.u32 %v530, 7
    %v532 = vsub.s32 0, %v531
    %v533 = vrot.slane %v525, %v532
    %535 = vbcast.lane.b32.xlu0 %v533, 256
    %v536 = vpop.permute.xlu0 %535
    %s538 = sor.u32 256, 8
    %539 = vbcast.lane.b32.xlu0 %v533, %s538
    %v540 = vpop.permute.xlu0 %539
    %v541 = vlaneseq
    %v542 = vshrl.u32 %v541, 7
    %v543 = vsub.s32 1, %v542
    %v544 = vrot.slane %v525, %v543
    %546 = vbcast.lane.b32.xlu0 %v544, 256
    %v547 = vpop.permute.xlu0 %546
    %s549 = sor.u32 256, 8
    %550 = vbcast.lane.b32.xlu0 %v544, %s549
    %v551 = vpop.permute.xlu0 %550
    %v552 = vmul.f32 %v526, %v536
    %v553 = vmul.f32 %v527, %v540
    %v554 = vmul.f32 %v528, %v547
    %v555 = vmul.f32 %v529, %v551
    %v556 = vpack.c.bf16 %v553, %v552
    %v557 = vpack.c.bf16 %v555, %v554
    %v558 = vld [vmem:[#allocation9] sm:$0xf]
    %v559 = vld [vmem:[#allocation9 + $0x4] sm:$0xf]
    %v560 = vld [vmem:[#allocation9 + $0x8] sm:$0xf]
    %v561 = vld [vmem:[#allocation9 + $0xc] sm:$0xf]
    %v562 = vld [vmem:[#allocation11] sm:$0x1]
    %v564 = vlaneseq
    %v565 = vshrl.u32 %v564, 7
    %v566 = vsub.s32 0, %v565
    %v567 = vrot.slane %v562, %v566
    %v573 = vunpack.c.l.b16 %v558
    %v574 = vunpack.c.l.b16 %v559
    %v575 = vunpack.c.l.b16 %v560
    %v576 = vunpack.c.l.b16 %v561
    %v577 = vpack.c.b16 %v574, %v573
    %v578 = vpack.c.b16 %v576, %v575
    %vm581 = vcmask 261120
    %v583 = vsel %vm581, %v556, 0
    %v586 = vsel %vm581, %v557, 0
    %588 = vmatprep.subr.bf16.mxu0 0
    %589 = vmatpush1.bf16.msra.mxu0 %v577
    %590 = vmatprep.subr.bf16.mxu0 0
    %591 = vmatpush1.bf16.msra.mxu0 %v578
    %592 = vmatprep.subr.bf16.mxu0 0
    %593 = vmatpush1.bf16.msra.mxu0 0
    %594 = vmatprep.subr.bf16.mxu0 0
    %595 = vmatpush1.bf16.msra.mxu0 0
    %596 = vmatprep.subr.bf16.mxu0 0
    %597 = vmatpush1.bf16.msra.mxu0 0
    %598 = vmatprep.subr.bf16.mxu0 0
    %599 = vmatpush1.bf16.msra.mxu0 0
    %600 = vmatprep.subr.bf16.mxu0 0
    %601 = vmatpush1.bf16.msra.mxu0 0
    %602 = vmatprep.subr.bf16.mxu0 0
    %603 = vmatpush1.bf16.msra.mxu0 0
    %604 = vmatprep.subr.bf16.mxu0 0
    %605 = vmatpush1.bf16.msra.mxu0 0
    %606 = vmatprep.subr.bf16.mxu0 0
    %607 = vmatpush1.bf16.msra.mxu0 0
    %608 = vmatprep.subr.bf16.mxu0 0
    %609 = vmatpush1.bf16.msra.mxu0 0
    %610 = vmatprep.subr.bf16.mxu0 0
    %611 = vmatpush1.bf16.msra.mxu0 0
    %612 = vmatprep.subr.bf16.mxu0 0
    %613 = vmatpush1.bf16.msra.mxu0 0
    %614 = vmatprep.subr.bf16.mxu0 0
    %615 = vmatpush1.bf16.msra.mxu0 0
    %616 = vmatprep.subr.bf16.mxu0 0
    %617 = vmatpush1.bf16.msra.mxu0 0
    %618 = vmatprep.subr.bf16.mxu0 0
    %619 = vmatpush1.bf16.msra.mxu0 0
    %620 = vmatprep.mubr.bf16.mxu0 0
    %621 = vmatmul.mubr.bf16.gmra.mrb[0].mxu0 %v583
    %v622 = vpop.f32.mrb[0].mxu0
    %v623 = vadd.f32 %v567, %v622
    %v624 = vpop.f32.mrb[0].mxu0
    %v625 = vpop.f32.mrb[0].mxu0
    %v626 = vadd.f32 %v567, %v625
    %v627 = vpop.f32.mrb[0].mxu0
    %628 = vmatprep.mubr.bf16.mxu0 0
    %629 = vmatmul.mubr.bf16.gmra.mrb[0].mxu0 %v586
    %v630 = vpop.f32.mrb[0].mxu0
    %v631 = vadd.f32 %v567, %v630
    %v632 = vpop.f32.mrb[0].mxu0
    %v633 = vpop.f32.mrb[0].mxu0
    %v634 = vadd.f32 %v567, %v633
    %v635 = vpop.f32.mrb[0].mxu0
    %636 = vdwg.mxu0
    %v637 = vtanh.pop %v623
    %v638 = vtanh.pop %v626
    %v639 = vtanh.pop %v631
    %v640 = vtanh.pop %v634
    %v643 = vrot.slane %v639, 7
    %vm644 = vcmask 1041409
    %v645 = vsel %vm644, %v643, %v637
    %vm647 = vcmask 25600
    %648 = vst.msk [vmem:[#allocation2] sm:$0x3] %vm647, %v645
    %vm649 = vcmask 1042434
    %v650 = vsel %vm649, %v643, %v637
    %651 = vrot.lane.b32.xlu0 %v650, 4
    %v652 = vpop.permute.xlu0 %651
    %vm654 = vcmask 59425
    %655 = vst.msk [vmem:[#allocation2 - $0x1] sm:$0x6] %vm654, %v652
    %vm656 = vcmask 1043459
    %v657 = vsel %vm656, %v643, %v637
    %658 = vrot.lane.b32.xlu0 %v657, 8
    %v659 = vpop.permute.xlu0 %658
    %vm661 = vcmask 93250
    %662 = vst.msk [vmem:[#allocation2 - $0x2] sm:$0xc] %vm661, %v659
    %vm663 = vcmask 1044484
    %v664 = vsel %vm663, %v643, %v637
    %665 = vrot.lane.b32.xlu0 %v664, 12
    %v666 = vpop.permute.xlu0 %665
    %vm668 = vcmask 127075
    %669 = vst.msk [vmem:[#allocation2 - $0x3] sm:$0x18] %vm668, %v666
    %vm670 = vcmask 1045509
    %v671 = vsel %vm670, %v643, %v637
    %672 = vrot.lane.b32.xlu0 %v671, 16
    %v673 = vpop.permute.xlu0 %672
    %vm675 = vcmask 160900
    %676 = vst.msk [vmem:[#allocation2 - $0x4] sm:$0x30] %vm675, %v673
    %vm677 = vcmask 1046534
    %v678 = vsel %vm677, %v643, %v637
    %679 = vrot.lane.b32.xlu0 %v678, 20
    %v680 = vpop.permute.xlu0 %679
    %vm682 = vcmask 194725
    %683 = vst.msk [vmem:[#allocation2 - $0x5] sm:$0x60] %vm682, %v680
    %vm684 = vcmask 1047559
    %v685 = vsel %vm684, %v643, %v637
    %686 = vrot.lane.b32.xlu0 %v685, 24
    %v687 = vpop.permute.xlu0 %686
    %vm689 = vcmask 228550
    %690 = vst.msk [vmem:[#allocation2 - $0x6] sm:$0xc0] %vm689, %v687
    %691 = vrot.lane.b32.xlu0 %v637, 28
    %v692 = vpop.permute.xlu0 %691
    %693 = vrot.lane.b32.xlu0 %v643, 28
    %v694 = vpop.permute.xlu0 %693
    %vm697 = vcmask 261351
    %698 = vst.msk [vmem:[#allocation2 - $0x7] sm:$0x80] %vm697, %v692
    %vm699 = vcmask 254176
    %700 = vst.msk [vmem:[#allocation2 + $0x1] sm:$0x1] %vm699, %v694
    %v703 = vrot.slane %v640, 7
    %v704 = vsel %vm644, %v703, %v638
    %705 = vrot.lane.b32.xlu0 %v704, 32
    %v706 = vpop.permute.xlu0 %705
    %vm708 = vcmask 288000
    %709 = vst.msk [vmem:[#allocation2] sm:$0x3] %vm708, %v706
    %v710 = vsel %vm649, %v703, %v638
    %711 = vrot.lane.b32.xlu0 %v710, 36
    %v712 = vpop.permute.xlu0 %711
    %vm714 = vcmask 321825
    %715 = vst.msk [vmem:[#allocation2 - $0x1] sm:$0x6] %vm714, %v712
    %v716 = vsel %vm656, %v703, %v638
    %717 = vrot.lane.b32.xlu0 %v716, 40
    %v718 = vpop.permute.xlu0 %717
    %vm720 = vcmask 355650
    %721 = vst.msk [vmem:[#allocation2 - $0x2] sm:$0xc] %vm720, %v718
    %v722 = vsel %vm663, %v703, %v638
    %723 = vrot.lane.b32.xlu0 %v722, 44
    %v724 = vpop.permute.xlu0 %723
    %vm726 = vcmask 389475
    %727 = vst.msk [vmem:[#allocation2 - $0x3] sm:$0x18] %vm726, %v724
    %v728 = vsel %vm670, %v703, %v638
    %729 = vrot.lane.b32.xlu0 %v728, 48
    %v730 = vpop.permute.xlu0 %729
    %vm732 = vcmask 423300
    %733 = vst.msk [vmem:[#allocation2 - $0x4] sm:$0x30] %vm732, %v730
    %v734 = vsel %vm677, %v703, %v638
    %735 = vrot.lane.b32.xlu0 %v734, 52
    %v736 = vpop.permute.xlu0 %735
    %vm738 = vcmask 457125
    %739 = vst.msk [vmem:[#allocation2 - $0x5] sm:$0x60] %vm738, %v736
    %v740 = vsel %vm684, %v703, %v638
    %741 = vrot.lane.b32.xlu0 %v740, 56
    %v742 = vpop.permute.xlu0 %741
    %vm744 = vcmask 490950
    %745 = vst.msk [vmem:[#allocation2 - $0x6] sm:$0xc0] %vm744, %v742
    %746 = vrot.lane.b32.xlu0 %v638, 60
    %v747 = vpop.permute.xlu0 %746
    %748 = vrot.lane.b32.xlu0 %v703, 60
    %v749 = vpop.permute.xlu0 %748
    %vm752 = vcmask 523751
    %753 = vst.msk [vmem:[#allocation2 - $0x7] sm:$0x80] %vm752, %v747
    %vm754 = vcmask 516576
    %755 = vst.msk [vmem:[#allocation2 + $0x1] sm:$0x1] %vm754, %v749
    %v756 = vld [vmem:[#allocation2] sm:$0x3]
    %v757 = vpack.c.bf16 %v756, %v756
    %v758 = vld [vmem:[#allocation12] sm:$0xf]
    %v759 = vld [vmem:[#allocation12 + $0x4] sm:$0xf]
    %v760 = vld [vmem:[#allocation12 + $0x8] sm:$0xf]
    %v761 = vld [vmem:[#allocation12 + $0xc] sm:$0xf]
    %v762 = vld [vmem:[#allocation12 + $0x10] sm:$0xf]
    %v763 = vld [vmem:[#allocation12 + $0x14] sm:$0xf]
    %v764 = vld [vmem:[#allocation12 + $0x18] sm:$0xf]
    %v765 = vld [vmem:[#allocation12 + $0x1c] sm:$0xf]
    %v766 = vld [vmem:[#allocation14] sm:$0x1]
    %v768 = vlaneseq
    %v769 = vshrl.u32 %v768, 7
    %v770 = vsub.s32 0, %v769
    %v771 = vrot.slane %v766, %v770
    %v781 = vunpack.c.l.b16 %v758
    %v782 = vunpack.c.l.b16 %v759
    %v783 = vunpack.c.l.b16 %v760
    %v784 = vunpack.c.l.b16 %v761
    %v785 = vunpack.c.l.b16 %v762
    %v786 = vunpack.c.l.b16 %v763
    %v787 = vunpack.c.l.b16 %v764
    %v788 = vunpack.c.l.b16 %v765
    %v789 = vpack.c.b16 %v782, %v781
    %v790 = vpack.c.b16 %v784, %v783
    %v791 = vpack.c.b16 %v786, %v785
    %v792 = vpack.c.b16 %v788, %v787
    %vm797 = vcmask 523264
    %v799 = vsel %vm797, %v757, 0
    %801 = vmatprep.subr.bf16.mxu0 0
    %802 = vmatpush1.bf16.msra.mxu0 %v789
    %803 = vmatprep.subr.bf16.mxu0 0
    %804 = vmatpush1.bf16.msra.mxu0 %v790
    %805 = vmatprep.subr.bf16.mxu0 0
    %806 = vmatpush1.bf16.msra.mxu0 %v791
    %807 = vmatprep.subr.bf16.mxu0 0
    %808 = vmatpush1.bf16.msra.mxu0 %v792
    %809 = vmatprep.subr.bf16.mxu0 0
    %810 = vmatpush1.bf16.msra.mxu0 0
    %811 = vmatprep.subr.bf16.mxu0 0
    %812 = vmatpush1.bf16.msra.mxu0 0
    %813 = vmatprep.subr.bf16.mxu0 0
    %814 = vmatpush1.bf16.msra.mxu0 0
    %815 = vmatprep.subr.bf16.mxu0 0
    %816 = vmatpush1.bf16.msra.mxu0 0
    %817 = vmatprep.subr.bf16.mxu0 0
    %818 = vmatpush1.bf16.msra.mxu0 0
    %819 = vmatprep.subr.bf16.mxu0 0
    %820 = vmatpush1.bf16.msra.mxu0 0
    %821 = vmatprep.subr.bf16.mxu0 0
    %822 = vmatpush1.bf16.msra.mxu0 0
    %823 = vmatprep.subr.bf16.mxu0 0
    %824 = vmatpush1.bf16.msra.mxu0 0
    %825 = vmatprep.subr.bf16.mxu0 0
    %826 = vmatpush1.bf16.msra.mxu0 0
    %827 = vmatprep.subr.bf16.mxu0 0
    %828 = vmatpush1.bf16.msra.mxu0 0
    %829 = vmatprep.subr.bf16.mxu0 0
    %830 = vmatpush1.bf16.msra.mxu0 0
    %831 = vmatprep.subr.bf16.mxu0 0
    %832 = vmatpush1.bf16.msra.mxu0 0
    %833 = vmatprep.mubr.bf16.mxu0 0
    %834 = vmatmul.mubr.bf16.gmra.mrb[0].mxu0 %v799
    %v835 = vpop.f32.mrb[0].mxu0
    %v836 = vadd.f32 %v771, %v835
    %v837 = vpop.f32.mrb[0].mxu0
    %v838 = vpop.f32.mrb[0].mxu0
    %v839 = vpop.f32.mrb[0].mxu0
    %840 = vdwg.mxu0
    %v841 = vmax.f32 %v836, 0.0
    %v842 = vpack.c.bf16 %v841, %v841
    %v843 = vld [vmem:[#allocation15] sm:$0xf]
    %v844 = vld [vmem:[#allocation15 + $0x4] sm:$0xf]
    %v845 = vld [vmem:[#allocation15 + $0x8] sm:$0xf]
    %v846 = vld [vmem:[#allocation15 + $0xc] sm:$0xf]
    %v847 = vld [vmem:[#allocation17] sm:$0x1]
    %v849 = vlaneseq
    %v850 = vshrl.u32 %v849, 7
    %v851 = vsub.s32 0, %v850
    %v852 = vrot.slane %v847, %v851
    %v858 = vunpack.c.l.b16 %v843
    %v859 = vunpack.c.l.b16 %v844
    %v860 = vunpack.c.l.b16 %v845
    %v861 = vunpack.c.l.b16 %v846
    %v862 = vpack.c.b16 %v859, %v858
    %v863 = vpack.c.b16 %v861, %v860
    %v867 = vsel %vm581, %v842, 0
    %869 = vmatprep.subr.bf16.mxu0 0
    %870 = vmatpush1.bf16.msra.mxu0 %v862
    %871 = vmatprep.subr.bf16.mxu0 0
    %872 = vmatpush1.bf16.msra.mxu0 %v863
    %873 = vmatprep.subr.bf16.mxu0 0
    %874 = vmatpush1.bf16.msra.mxu0 0
    %875 = vmatprep.subr.bf16.mxu0 0
    %876 = vmatpush1.bf16.msra.mxu0 0
    %877 = vmatprep.subr.bf16.mxu0 0
    %878 = vmatpush1.bf16.msra.mxu0 0
    %879 = vmatprep.subr.bf16.mxu0 0
    %880 = vmatpush1.bf16.msra.mxu0 0
    %881 = vmatprep.subr.bf16.mxu0 0
    %882 = vmatpush1.bf16.msra.mxu0 0
    %883 = vmatprep.subr.bf16.mxu0 0
    %884 = vmatpush1.bf16.msra.mxu0 0
    %885 = vmatprep.subr.bf16.mxu0 0
    %886 = vmatpush1.bf16.msra.mxu0 0
    %887 = vmatprep.subr.bf16.mxu0 0
    %888 = vmatpush1.bf16.msra.mxu0 0
    %889 = vmatprep.subr.bf16.mxu0 0
    %890 = vmatpush1.bf16.msra.mxu0 0
    %891 = vmatprep.subr.bf16.mxu0 0
    %892 = vmatpush1.bf16.msra.mxu0 0
    %893 = vmatprep.subr.bf16.mxu0 0
    %894 = vmatpush1.bf16.msra.mxu0 0
    %895 = vmatprep.subr.bf16.mxu0 0
    %896 = vmatpush1.bf16.msra.mxu0 0
    %897 = vmatprep.subr.bf16.mxu0 0
    %898 = vmatpush1.bf16.msra.mxu0 0
    %899 = vmatprep.subr.bf16.mxu0 0
    %900 = vmatpush1.bf16.msra.mxu0 0
    %901 = vmatprep.mubr.bf16.mxu0 0
    %902 = vmatmul.mubr.bf16.gmra.mrb[0].mxu0 %v867
    %v903 = vpop.f32.mrb[0].mxu0
    %v904 = vadd.f32 %v852, %v903
    %v905 = vpop.f32.mrb[0].mxu0
    %v906 = vpop.f32.mrb[0].mxu0
    %v907 = vpop.f32.mrb[0].mxu0
    %908 = vdwg.mxu0
    %vm909 = vcmask 58368
    %910 = vst.msk [vmem:[#allocation18] sm:$0x3] %vm909, %v904
    // Predicated region
    $region74: #{tpu_custom_call.1} parent=1 // pred_check
      _
    $region75: #{tpu_custom_call.1} parent=1 // pred_check_branch
      %912 = sbr.rel (0) target = $region77
    $region76: #{tpu_custom_call.1} parent=1 // pred_region
      %s914 = ssub.s32 32, 32
      %915 = vsyncadd [#allocation5], %s914
      %s917 = sshll.u32 [#allocation18], 4
      %s918 = int_to_ptr.vmem [resolvable:$true] %s917
      %920 = dma.vmem_to_hbm [thread:$0]  %s918, 32, %s9, [#allocation5]
    $region77: #{tpu_custom_call.1} parent=1 // pred_fallthru
      _
    // Predicated region
    $region78: #{tpu_custom_call.1} parent=1 // pred_check
      _
    $region79: #{tpu_custom_call.1} parent=1 // pred_check_branch
      %922 = sbr.rel (0) target = $region81
    $region80: #{tpu_custom_call.1} parent=1 // pred_region
      %923 = dma.done [#allocation5], 32
    $region81: #{tpu_custom_call.1} parent=1 // pred_fallthru
      _
    %924 = vsyncpa [#allocation4], 1
    %925 = vsyncpa [#allocation7], 1
    %926 = vsyncpa [#allocation10], 1
    %927 = vsyncpa [#allocation13], 1
    %928 = vsyncpa [#allocation16], 1
    %929 = vsyncpa [#allocation5], 1

</llo_original>
